<compile_context>
chip_gen: v6e
topology: v6e:2x2x1
jax: 0.10.0
libtpu: 0.0.40
codegen_flags: <defaults>
</compile_context>

<pallas_src>
import functools

import jax
import jax.numpy as jnp
from jax import lax
from jax.experimental import pallas as pl
from jax.experimental.pallas import tpu as pltpu

NUM_CLASSES = 41      # module __init__: weight = [0.25] + [1.0] * 40
_W0 = 0.25            # class-0 weight; every other class weighs 1.0
_MAX_TILE = 16384     # HW lanes per tile (multiple of 128)


def _ce_loss_kernel(logits_ref, tgt_ref, out_ref, *, hw, tile, tiles_j, n_tiles, w0):
    # logits_ref: (1, C, T)   class on sublanes, pixels on lanes
    # tgt_ref:    (1, 1, T)   int32 class ids
    # out_ref:    (1, 1, 128) f32 -- resident accumulator across the HW ("arbitrary") axis
    s = pl.program_id(1)          # HW-split index ("parallel")
    j = pl.program_id(2)          # HW-tile index within the split ("arbitrary")

    @pl.when(j == 0)
    def _():
        out_ref[...] = jnp.zeros_like(out_ref)

    x = logits_ref[0].astype(jnp.float32)            # (C, T)
    t = tgt_ref[0]                                   # (1, T) int32
    c, tsz = x.shape

    # numerically-stable log-softmax pieces along the class (sublane) axis
    m = jnp.max(x, axis=0, keepdims=True)            # (1, T)
    z = x - m                                        # (C, T)  VALU
    ez = jnp.exp(z)                                  # (C, T)  EUP

    # class-axis reductions on the (otherwise idle) MXU: ones(1,C) @ (C,T) -> (1,T)
    ones_row = jnp.ones((1, c), jnp.float32)
    sum_exp = jnp.dot(ones_row, ez, preferred_element_type=jnp.float32)       # (1, T)
    class_ids = lax.broadcasted_iota(jnp.int32, (c, tsz), 0)                  # (C, T)
    picked_z = jnp.dot(ones_row, jnp.where(class_ids == t, z, 0.0),
                       preferred_element_type=jnp.float32)                    # (1, T)

    # per-pixel (1,T) epilogue: log-sum-exp, fixed class weight, -log-prob
    lse = jnp.log(sum_exp)                           # (1, T)
    w_pix = jnp.where(t == 0, w0, 1.0)               # (1, T) module's fixed weight pattern
    loss = w_pix * (lse - picked_z)                  # (1, T) == -w[t] * log_softmax(x)[t]

    if hw % tile == 0:
        # no ragged tail: skip the mask entirely
        out_ref[...] += jnp.sum(loss)
    else:
        g = s * tiles_j + j                          # global HW-tile index
        is_tail = g == n_tiles - 1

        @pl.when(is_tail)
        def _():
            # select (not multiply) so garbage logits in the overhang can't leak NaN/inf
            pix = g * tile + lax.broadcasted_iota(jnp.int32, (1, tsz), 1)
            out_ref[...] += jnp.sum(jnp.where(pix < hw, loss, 0.0))

        @pl.when(jnp.logical_not(is_tail))
        def _():
            out_ref[...] += jnp.sum(loss)

    @pl.when(j == tiles_j - 1)
    def _():
        # divisor is the true H*W: matches cross_entropy(reduction='none').mean((1,2))
        out_ref[...] = out_ref[...] * (1.0 / hw)


@jax.jit
def ce_loss(pred, target):
    """pred: (N, C, H, W); target: (N, Kt, H, W) with class ids in channel 0.
    Returns (N,) f32: mean over H*W of -weight[t] * log_softmax(pred)[t],
    with weight = [0.25] + [1.0]*40 (fixed in the module's __init__)."""
    assert pred.ndim == 4
    n, c, h, wd = pred.shape
    hw = h * wd

    # free reshape only (class stays on sublanes, pixels on lanes); no transpose,
    # no wrapper upcast -- bf16 logits stay bf16 in HBM and are cast in-kernel.
    logits = pred.reshape(n, c, hw)
    tgt = target[:, 0, :, :].astype(jnp.int32).reshape(n, 1, hw)

    # small images: single whole-image tile; large images: 16384-lane tiles, pipelined.
    if hw <= _MAX_TILE:
        tile, n_tiles = hw, 1
    else:
        tile, n_tiles = _MAX_TILE, pl.cdiv(hw, _MAX_TILE)

    # Keep both v7x TensorCores busy when N is 1: split the HW tiles into two
    # independent "parallel" halves (combined in the wrapper).  Costless on
    # single-TC chips; only taken when the tile count divides evenly.
    n_split = 2 if (n == 1 and n_tiles >= 2 and n_tiles % 2 == 0) else 1
    tiles_j = n_tiles // n_split

    kernel = functools.partial(_ce_loss_kernel, hw=hw, tile=tile,
                               tiles_j=tiles_j, n_tiles=n_tiles, w0=_W0)

    out = pl.pallas_call(
        kernel,
        out_shape=jax.ShapeDtypeStruct((n * n_split, 1, 128), jnp.float32),
        grid_spec=pltpu.PrefetchScalarGridSpec(
            num_scalar_prefetch=0,
            grid=(n, n_split, tiles_j),
            in_specs=[
                pl.BlockSpec((1, c, tile), lambda i, s, j: (i, 0, s * tiles_j + j)),
                pl.BlockSpec((1, 1, tile), lambda i, s, j: (i, 0, s * tiles_j + j)),
            ],
            out_specs=pl.BlockSpec((1, 1, 128),
                                   lambda i, s, j: (i * n_split + s, 0, 0)),
        ),
        compiler_params=pltpu.CompilerParams(
            dimension_semantics=("parallel", "parallel", "arbitrary"),
            vmem_limit_bytes=48 << 20,
        ),
    )(logits, tgt)

    # each partial is already divided by hw, so summing the splits is exact
    return out[:, 0, 0].reshape(n, n_split).sum(axis=1)


def _reference(pred, target, weight):
    # pure-JAX reference of F.cross_entropy(..., weight, reduction='none').mean((1,2))
    logp = jax.nn.log_softmax(pred.astype(jnp.float32), axis=1)            # (N,C,H,W)
    tgt = target[:, 0, :, :].astype(jnp.int32)                             # (N,H,W)
    picked = jnp.take_along_axis(logp, tgt[:, None, :, :], axis=1)[:, 0]   # (N,H,W)
    loss = -weight[tgt] * picked
    return loss.mean(axis=(1, 2))


if __name__ == "__main__":
    key = jax.random.PRNGKey(0)
    k1, k2, k3, k4 = jax.random.split(key, 4)

    # deterministic parameter from the module's __init__: [0.25, 1.0 x 40]
    weight = jnp.concatenate([jnp.array([_W0], jnp.float32),
                              jnp.ones((NUM_CLASSES - 1,), jnp.float32)])

    # --- Test 1: small single-tile path (N=2, 16x16) ---
    N, C, H, W = 2, NUM_CLASSES, 16, 16
    pred = jax.random.normal(k1, (N, C, H, W), dtype=jnp.float32)
    # float target, cast to int in-wrapper (mirrors the module's .type(torch.long))
    target = jax.random.randint(k2, (N, 1, H, W), 0, C).astype(jnp.float32)

    out = jax.block_until_ready(ce_loss(pred, target))
    ref = _reference(pred, target, weight)
    assert out.shape == (N,)
    assert jnp.allclose(out, ref, atol=1e-4, rtol=1e-4), (out, ref)

    # --- Test 2: multi-tile path (hw > tile, ragged tail, HW split across cores) ---
    N2, H2, W2 = 1, 132, 130              # hw = 17160: 2 tiles of 16384, partial last tile
    pred2 = jax.random.normal(k3, (N2, C, H2, W2), dtype=jnp.float32)
    target2 = jax.random.randint(k4, (N2, 1, H2, W2), 0, C).astype(jnp.float32)

    out2 = jax.block_until_ready(ce_loss(pred2, target2))
    ref2 = _reference(pred2, target2, weight)
    assert out2.shape == (N2,)
    assert jnp.allclose(out2, ref2, atol=1e-4, rtol=1e-4), (out2, ref2)

    print("KERNEL_OK")
</pallas_src>

<mosaic_0001>
module attributes {stable_mosaic.version = 11 : i64} {
  func.func @_ce_loss_kernel(%arg0: i32, %arg1: i32, %arg2: i32, %arg3: memref<1x41x256xf32, #tpu.memory_space<vmem>>, %arg4: memref<1x1x256xi32, #tpu.memory_space<vmem>>, %arg5: memref<1x1x128xf32, #tpu.memory_space<vmem>>) attributes {dimension_semantics = [#tpu.dimension_semantics<parallel>, #tpu.dimension_semantics<parallel>, #tpu.dimension_semantics<arbitrary>], iteration_bounds = array<i64: 2, 1, 1>, scalar_prefetch = 0 : i64, scratch_operands = 0 : i64, tpu.core_type = #tpu.core_type<tc>, window_params = [{transform_indices = @transform_0, window_bounds = array<i64: 1, 41, 256>}, {transform_indices = @transform_1, window_bounds = array<i64: 1, 1, 256>}, {transform_indices = @transform_2, window_bounds = array<i64: 1, 1, 128>}]} {
    %c0_i32 = arith.constant 0 : i32
    %0 = arith.cmpi eq, %arg2, %c0_i32 : i32
    %1 = arith.extui %0 : i1 to i32
    %c0_i32_0 = arith.constant 0 : i32
    %2 = arith.cmpi ne, %1, %c0_i32_0 : i32
    scf.if %2 {
      %cst_22 = arith.constant 0.000000e+00 : f32
      %39 = vector.broadcast %cst_22 : f32 to vector<1x1x128xf32>
      %c0_23 = arith.constant 0 : index
      %c0_24 = arith.constant 0 : index
      %c0_25 = arith.constant 0 : index
      %40 = vector.load %arg5[%c0_23, %c0_24, %c0_25] : memref<1x1x128xf32, #tpu.memory_space<vmem>>, vector<1x1x128xf32>
      tpu.vector_store %arg5[%c0_23, %c0_24, %c0_25], %39 {strides = array<i32>} : memref<1x1x128xf32, #tpu.memory_space<vmem>>, vector<1x1x128xf32>,
    } else {
    }
    %c0 = arith.constant 0 : index
    %c0_1 = arith.constant 0 : index
    %c0_2 = arith.constant 0 : index
    %3 = vector.load %arg3[%c0, %c0_1, %c0_2] : memref<1x41x256xf32, #tpu.memory_space<vmem>>, vector<1x41x256xf32>
    %4 = vector.shape_cast %3 : vector<1x41x256xf32> to vector<41x256xf32>
    %c0_3 = arith.constant 0 : index
    %c0_4 = arith.constant 0 : index
    %c0_5 = arith.constant 0 : index
    %5 = vector.load %arg4[%c0_3, %c0_4, %c0_5] : memref<1x1x256xi32, #tpu.memory_space<vmem>>, vector<1x1x256xi32>
    %6 = vector.shape_cast %5 : vector<1x1x256xi32> to vector<1x256xi32>
    %cst = arith.constant dense<0xFF800000> : vector<256xf32>
    %7 = vector.multi_reduction <maximumf>, %4, %cst [0] : vector<41x256xf32> to vector<256xf32>
    %8 = vector.shape_cast %7 : vector<256xf32> to vector<1x256xf32>
    %9 = vector.broadcast %8 : vector<1x256xf32> to vector<41x256xf32>
    %10 = arith.subf %4, %9 : vector<41x256xf32>
    %11 = math.exp %10 : vector<41x256xf32>
    %cst_6 = arith.constant 1.000000e+00 : f32
    %12 = vector.broadcast %cst_6 : f32 to vector<1x41xf32>
    %cst_7 = arith.constant dense<0.000000e+00> : vector<1x256xf32>
    %13 = tpu.matmul %12, %11, %cst_7 {dimension_numbers = #tpu.dot_dimension_numbers<[1], [0], [0], [1], [0, 0, 1, 1], [], []>} : vector<1x41xf32>, vector<41x256xf32>, vector<1x256xf32> -> vector<1x256xf32>
    %14 = tpu.iota {dimensions = array<i32: 0>} : vector<41x256xi32>
    %15 = vector.broadcast %6 : vector<1x256xi32> to vector<41x256xi32>
    %16 = arith.cmpi eq, %14, %15 : vector<41x256xi32>
    %cst_8 = arith.constant 0.000000e+00 : f32
    %17 = vector.broadcast %cst_8 : f32 to vector<41x256xf32>
    %18 = arith.select %16, %10, %17 : vector<41x256xi1>, vector<41x256xf32>
    %cst_9 = arith.constant dense<0.000000e+00> : vector<1x256xf32>
    %19 = tpu.matmul %12, %18, %cst_9 {dimension_numbers = #tpu.dot_dimension_numbers<[1], [0], [0], [1], [0, 0, 1, 1], [], []>} : vector<1x41xf32>, vector<41x256xf32>, vector<1x256xf32> -> vector<1x256xf32>
    %20 = math.log %13 : vector<1x256xf32>
    %c0_i32_10 = arith.constant 0 : i32
    %21 = vector.broadcast %c0_i32_10 : i32 to vector<1x256xi32>
    %22 = arith.cmpi eq, %6, %21 : vector<1x256xi32>
    %cst_11 = arith.constant 2.500000e-01 : f32
    %cst_12 = arith.constant 1.000000e+00 : f32
    %23 = vector.broadcast %cst_11 : f32 to vector<1x256xf32>
    %24 = vector.broadcast %cst_12 : f32 to vector<1x256xf32>
    %25 = arith.select %22, %23, %24 : vector<1x256xi1>, vector<1x256xf32>
    %26 = arith.subf %20, %19 : vector<1x256xf32>
    %27 = arith.mulf %25, %26 : vector<1x256xf32>
    %c0_13 = arith.constant 0 : index
    %c0_14 = arith.constant 0 : index
    %c0_15 = arith.constant 0 : index
    %28 = vector.load %arg5[%c0_13, %c0_14, %c0_15] : memref<1x1x128xf32, #tpu.memory_space<vmem>>, vector<1x1x128xf32>
    %29 = vector.shape_cast %27 : vector<1x256xf32> to vector<1x1x256xf32>
    %cst_16 = arith.constant dense<0.000000e+00> : vector<1xf32>
    %30 = vector.multi_reduction <add>, %29, %cst_16 [1, 2] : vector<1x1x256xf32> to vector<1xf32>
    %31 = vector.shape_cast %30 : vector<1xf32> to vector<1x1x1xf32>
    %32 = vector.extract %31[0, 0, 0] : f32 from vector<1x1x1xf32>
    %33 = vector.broadcast %32 : f32 to vector<1x1x128xf32>
    %34 = arith.addf %28, %33 : vector<1x1x128xf32>
    %c0_17 = arith.constant 0 : index
    %c0_18 = arith.constant 0 : index
    %c0_19 = arith.constant 0 : index
    %35 = vector.load %arg5[%c0_17, %c0_18, %c0_19] : memref<1x1x128xf32, #tpu.memory_space<vmem>>, vector<1x1x128xf32>
    tpu.vector_store %arg5[%c0_17, %c0_18, %c0_19], %34 {strides = array<i32>} : memref<1x1x128xf32, #tpu.memory_space<vmem>>, vector<1x1x128xf32>,
    %c0_i32_20 = arith.constant 0 : i32
    %36 = arith.cmpi eq, %arg2, %c0_i32_20 : i32
    %37 = arith.extui %36 : i1 to i32
    %c0_i32_21 = arith.constant 0 : i32
    %38 = arith.cmpi ne, %37, %c0_i32_21 : i32
    scf.if %38 {
      %c0_22 = arith.constant 0 : index
      %c0_23 = arith.constant 0 : index
      %c0_24 = arith.constant 0 : index
      %39 = vector.load %arg5[%c0_22, %c0_23, %c0_24] : memref<1x1x128xf32, #tpu.memory_space<vmem>>, vector<1x1x128xf32>
      %cst_25 = arith.constant 3.906250e-03 : f32
      %40 = vector.broadcast %cst_25 : f32 to vector<1x1x128xf32>
      %41 = arith.mulf %39, %40 : vector<1x1x128xf32>
      %c0_26 = arith.constant 0 : index
      %c0_27 = arith.constant 0 : index
      %c0_28 = arith.constant 0 : index
      %42 = vector.load %arg5[%c0_26, %c0_27, %c0_28] : memref<1x1x128xf32, #tpu.memory_space<vmem>>, vector<1x1x128xf32>
      tpu.vector_store %arg5[%c0_26, %c0_27, %c0_28], %41 {strides = array<i32>} : memref<1x1x128xf32, #tpu.memory_space<vmem>>, vector<1x1x128xf32>,
    } else {
    }
    return
  }
  func.func @transform_0(%arg0: i32, %arg1: i32, %arg2: i32) -> (i32, i32, i32) {
    %c1_i32 = arith.constant 1 : i32
    %0 = arith.muli %arg1, %c1_i32 : i32
    %1 = arith.addi %0, %arg2 : i32
    %c0_i32 = arith.constant 0 : i32
    %c0_i32_0 = arith.constant 0 : i32
    return %arg0, %c0_i32, %1 : i32, i32, i32
  }
  func.func @transform_1(%arg0: i32, %arg1: i32, %arg2: i32) -> (i32, i32, i32) {
    %c1_i32 = arith.constant 1 : i32
    %0 = arith.muli %arg1, %c1_i32 : i32
    %1 = arith.addi %0, %arg2 : i32
    %c0_i32 = arith.constant 0 : i32
    %c0_i32_0 = arith.constant 0 : i32
    return %arg0, %c0_i32, %1 : i32, i32, i32
  }
  func.func @transform_2(%arg0: i32, %arg1: i32, %arg2: i32) -> (i32, i32, i32) {
    %c1_i32 = arith.constant 1 : i32
    %0 = arith.muli %arg0, %c1_i32 : i32
    %1 = arith.addi %0, %arg1 : i32
    %c0_i32 = arith.constant 0 : i32
    %c0_i32_0 = arith.constant 0 : i32
    %c0_i32_1 = arith.constant 0 : i32
    return %1, %c0_i32, %c0_i32_0 : i32, i32, i32
  }
}

</mosaic_0001>

<llo_original>
// kernel: ce_loss.1
$region0: #{ce_loss.1}
  #allocation0 [shape = 'u32[]', space=smem, size = 0x4, offset = 0x4, fixed_abs, tag = 'smem constant byte address 0x4 - core index']
  #allocation1 [shape = 'u32[144,128]{1,0:T(1,128)}', space=vmem, size = 0x12000, scoped, tag = 'internal scratch']
  %s0 = inlined_call_operand.vmem [shape: f32[2,41,256], index: 0, kind: input, shape index: {}]
  %s1 = inlined_call_operand.vmem [shape: s32[2,1,256], index: 1, kind: input, shape index: {}]
  %s2 = inlined_call_operand.vmem [shape: f32[2,1,128], index: 2, kind: output, shape index: {}]
  %s3 = sld [smem:[#allocation0]]
  $region49: #{ce_loss.1} parent=0
    _
  %s5 = ssub.s32 1, %s3
  %s6 = scalar_select 0, %s5, %s3
  loop: start=0, step=1, limit=4
  $region2: #{ce_loss.1} parent=0 // loop_pre_header
    _
  $region3: #{ce_loss.1} parent=0 // loop_header
    %s8 = sphi 0, %s12
    %p9 = scmp.ge.s32.totalorder %s8, 4
    %s15 = sphi 0, %s34
    %s16 = sphi 0, %s30
    %s17 = sphi 0, %s26
    %s18 = sphi 0, %s15
    %s19 = sphi 0, %s16
    %s20 = sphi 0, %s17
    %s21 = sphi 0, %s18
    %s22 = sphi 0, %s19
    %s23 = sphi 0, %s20
    %s41 = sphi 0, %s43
    %s44 = sphi 0, %s41
    %s45 = sphi 0, %s44
    %s61 = sphi 0, %s45
    %s71 = sphi 0, %s73
    %s74 = sphi 0, %s71
    %s75 = sphi 0, %s74
    %s91 = sphi 0, %s75
    %s99 = sphi 0, %s101
    %s102 = sphi 0, %s99
    %s103 = sphi 0, %s102
    %s119 = sphi 0, %s103
  $region4: #{ce_loss.1} parent=0 // loop_header_branch
    %11 = sbr.rel (%p9) target = $region8
  $region5: #{ce_loss.1} parent=0 // loop_body
    %s13 = ssub.s32 %s8, 1
    %s14 = ssub.s32 %s8, 2
    %s24 = sadd.s32 1, %s17
    %p25 = scmp.ge.s32.totalorder %s24, 1
    %s26 = scalar_select %p25, 0, %s24
    %s27 = sadd.s32 1, %s16
    %s28 = scalar_select %p25, %s27, %s16
    %p29 = scmp.ge.s32.totalorder %s28, 1
    %s30 = scalar_select %p29, 0, %s28
    %s31 = sadd.s32 1, %s15
    %s32 = scalar_select %p29, %s31, %s15
    %p33 = scmp.ge.s32.totalorder %s32, 2
    %s34 = scalar_select %p33, 0, %s32
    %s35 = sadd.s32 %s16, %s17
    %s36 = sadd.s32 %s30, %s26
    %s37 = ssub.s32 %s15, %s34
    %s38 = ssub.s32 %s35, %s36
    %s39 = sor.u32 %s37, %s38
    %p40 = scmp.eq.s32.totalorder %s39, 0
    %s42 = sadd.s32 %s41, 1
    %s43 = scalar_select %p40, %s41, %s42
    %p46 = pneg %p40
    %p47 = scmp.eq.s32.totalorder %s8, 1
    %p48 = por %p46, %p47
    %p49 = scmp.ne.s32.totalorder %s41, %s44
    %p50 = scmp.eq.s32.totalorder %s8, 0
    %p51 = por %p49, %p50
    %p52 = scmp.ne.s32.totalorder %s41, %s44
    %p53 = scmp.eq.s32.totalorder %s13, 1
    %p54 = por %p52, %p53
    %p55 = scmp.ne.s32.totalorder %s44, %s45
    %p56 = scmp.eq.s32.totalorder %s13, 0
    %p57 = por %p55, %p56
    %p58 = scmp.ne.s32.totalorder %s44, %s45
    %p59 = scmp.eq.s32.totalorder %s14, 1
    %p60 = por %p58, %p59
    %p62 = scmp.ne.s32.totalorder %s45, %s61
    %p63 = scmp.eq.s32.totalorder %s14, 0
    %p64 = por %p62, %p63
    %s65 = sadd.s32 %s16, %s17
    %s66 = sadd.s32 %s30, %s26
    %s67 = ssub.s32 %s15, %s34
    %s68 = ssub.s32 %s65, %s66
    %s69 = sor.u32 %s67, %s68
    %p70 = scmp.eq.s32.totalorder %s69, 0
    %s72 = sadd.s32 %s71, 1
    %s73 = scalar_select %p70, %s71, %s72
    %p76 = pneg %p70
    %p77 = scmp.eq.s32.totalorder %s8, 1
    %p78 = por %p76, %p77
    %p79 = scmp.ne.s32.totalorder %s71, %s74
    %p80 = scmp.eq.s32.totalorder %s8, 0
    %p81 = por %p79, %p80
    %p82 = scmp.ne.s32.totalorder %s71, %s74
    %p83 = scmp.eq.s32.totalorder %s13, 1
    %p84 = por %p82, %p83
    %p85 = scmp.ne.s32.totalorder %s74, %s75
    %p86 = scmp.eq.s32.totalorder %s13, 0
    %p87 = por %p85, %p86
    %p88 = scmp.ne.s32.totalorder %s74, %s75
    %p89 = scmp.eq.s32.totalorder %s14, 1
    %p90 = por %p88, %p89
    %p92 = scmp.ne.s32.totalorder %s75, %s91
    %p93 = scmp.eq.s32.totalorder %s14, 0
    %p94 = por %p92, %p93
    %s95 = sadd.s32 %s15, %s16
    %s96 = sadd.s32 %s34, %s30
    %s97 = ssub.s32 %s95, %s96
    %p98 = scmp.eq.s32.totalorder %s97, 0
    %s100 = sadd.s32 %s99, 1
    %s101 = scalar_select %p98, %s99, %s100
    %p104 = pneg %p98
    %p105 = scmp.eq.s32.totalorder %s8, 1
    %p106 = por %p104, %p105
    %p107 = scmp.ne.s32.totalorder %s99, %s102
    %p108 = scmp.eq.s32.totalorder %s8, 0
    %p109 = por %p107, %p108
    %p110 = scmp.ne.s32.totalorder %s99, %s102
    %p111 = scmp.eq.s32.totalorder %s13, 1
    %p112 = por %p110, %p111
    %p113 = scmp.ne.s32.totalorder %s102, %s103
    %p114 = scmp.eq.s32.totalorder %s13, 0
    %p115 = por %p113, %p114
    %p116 = scmp.ne.s32.totalorder %s102, %s103
    %p117 = scmp.eq.s32.totalorder %s14, 1
    %p118 = por %p116, %p117
    %p120 = scmp.ne.s32.totalorder %s103, %s119
    %p121 = scmp.eq.s32.totalorder %s14, 0
    %p122 = por %p120, %p121
    %p123 = scmp.le.s32.totalorder 1, %s8
    %p124 = scmp.lt.s32.totalorder %s8, 3
    %p125 = pnand %p123, %p124
    %p126 = pneg %p125
    // Predicated region
    $region9: #{ce_loss.1} parent=5 // pred_check
      _
    $region10: #{ce_loss.1} parent=5 // pred_check_branch
      %128 = sbr.rel (%p125) target = $region12
    $region11: #{ce_loss.1} parent=5 // pred_region
      %s129 = ssub.s32 %s8, 1
    $region12: #{ce_loss.1} parent=5 // pred_fallthru
      _
    %p130 = scmp.lt.s32.totalorder %s8, 2
    // Predicated region
    $region13: #{ce_loss.1} parent=5 // pred_check
      %p131 = pneg %p130
    $region14: #{ce_loss.1} parent=5 // pred_check_branch
      %133 = sbr.rel (%p131) target = $region16
    $region15: #{ce_loss.1} parent=5 // pred_region
      // Predicated region
      $region17: #{ce_loss.1} parent=15 // pred_check
        %p134 = pneg %p51
      $region18: #{ce_loss.1} parent=15 // pred_check_branch
        %136 = sbr.rel (%p134) target = $region20
      $region19: #{ce_loss.1} parent=15 // pred_region
        %s137 = sadd.s32 %s16, %s17
        %s138 = smul.u32 2, %s137
        %p139 = scmp.lt.s32.totalorder %s15, 1
        %s140 = scalar_select %p139, %s15, 1
        %p141 = scmp.lt.s32.totalorder %s138, 1
        %s142 = scalar_select %p141, %s138, 1
        %s143 = smul.addr %s140, 12
        %s144 = sadd.s32 %s142, %s143
        %s145 = smul.addr %s144, 8
        %s146 = scalar_lea.vmem %s0, %s145
        %s147 = sadd.s32 %s16, %s17
        %s148 = smul.u32 2, %s147
      $region20: #{ce_loss.1} parent=15 // pred_fallthru
        _
      // Predicated region
      $region21: #{ce_loss.1} parent=15 // pred_check
        %p149 = pneg %p81
      $region22: #{ce_loss.1} parent=15 // pred_check_branch
        %151 = sbr.rel (%p149) target = $region24
      $region23: #{ce_loss.1} parent=15 // pred_region
        %s152 = sadd.s32 %s16, %s17
        %s153 = smul.u32 2, %s152
        %p154 = scmp.lt.s32.totalorder %s15, 1
        %s155 = scalar_select %p154, %s15, 1
        %p156 = scmp.lt.s32.totalorder %s153, 1
        %s157 = scalar_select %p156, %s153, 1
        %s158 = smul.addr %s155, 2
        %s159 = sadd.s32 %s157, %s158
        %s160 = scalar_lea.vmem %s1, %s159
        %s161 = sadd.s32 %s16, %s17
        %s162 = smul.u32 2, %s161
      $region24: #{ce_loss.1} parent=15 // pred_fallthru
        _
    $region16: #{ce_loss.1} parent=5 // pred_fallthru
      _
    %p163 = scmp.le.s32.totalorder 1, %s8
    %p164 = scmp.lt.s32.totalorder %s8, 3
    %p165 = pnand %p163, %p164
    %p166 = pneg %p165
    // Predicated region
    $region25: #{ce_loss.1} parent=5 // pred_check
      _
    $region26: #{ce_loss.1} parent=5 // pred_check_branch
      %168 = sbr.rel (%p165) target = $region28
    $region27: #{ce_loss.1} parent=5 // pred_region
      %s169 = ssub.s32 %s8, 1
      %s170 = sadd.s32 %s19, %s20
      %s171 = smul.u32 2, %s170
      %p172 = scmp.lt.s32.totalorder %s18, 1
      %s173 = scalar_select %p172, %s18, 1
      %p174 = scmp.lt.s32.totalorder %s171, 1
      %s175 = scalar_select %p174, %s171, 1
      %s176 = smul.addr %s173, 12
      %s177 = sadd.s32 %s175, %s176
      %s178 = smul.addr %s177, 8
      %s179 = scalar_lea.vmem %s0, %s178
      %p180 = pneg %p57
      %p181 = pneg %p54
      %s182 = sadd.s32 %s19, %s20
      %s183 = smul.u32 2, %s182
      %p184 = scmp.lt.s32.totalorder %s18, 1
      %s185 = scalar_select %p184, %s18, 1
      %p186 = scmp.lt.s32.totalorder %s183, 1
      %s187 = scalar_select %p186, %s183, 1
      %s188 = smul.addr %s185, 2
      %s189 = sadd.s32 %s187, %s188
      %s190 = scalar_lea.vmem %s1, %s189
      %p191 = pneg %p87
      %p192 = pneg %p84
      %p193 = pneg %p115
      %p194 = pneg %p112
      %s195 = sadd.s32 %s18, %s19
      %p196 = scmp.lt.s32.totalorder %s195, 1
      %s197 = scalar_select %p196, %s195, 1
      %s198 = scalar_lea.vmem %s2, %s197
      %s199 = sadd.s32 %s19, %s20
      %s200 = smul.u32 2, %s199
      %p201 = scmp.lt.s32.totalorder %s18, 1
      %s202 = scalar_select %p201, %s18, 1
      %p203 = scmp.lt.s32.totalorder %s200, 1
      %s204 = scalar_select %p203, %s200, 1
      %s205 = smul.addr %s202, 12
      %s206 = sadd.s32 %s204, %s205
      %s207 = smul.addr %s206, 8
      %s208 = scalar_lea.vmem %s0, %s207
      %s209 = sadd.s32 %s19, %s20
      %s210 = smul.u32 2, %s209
      %s211 = sadd.s32 %s19, %s20
      %s212 = smul.u32 2, %s211
      %p213 = scmp.lt.s32.totalorder %s18, 1
      %s214 = scalar_select %p213, %s18, 1
      %p215 = scmp.lt.s32.totalorder %s212, 1
      %s216 = scalar_select %p215, %s212, 1
      %s217 = smul.addr %s214, 2
      %s218 = sadd.s32 %s216, %s217
      %s219 = scalar_lea.vmem %s1, %s218
      %s220 = sadd.s32 %s19, %s20
      %s221 = smul.u32 2, %s220
      %s222 = sadd.s32 %s18, %s19
      %p223 = scmp.lt.s32.totalorder %s222, 1
      %s224 = scalar_select %p223, %s222, 1
      %s225 = scalar_lea.vmem %s2, %s224
      %s226 = sadd.s32 %s18, %s19
      %p227 = scmp.eq.s32.totalorder %s20, 0
      // Predicated region
      $region29: #{ce_loss.1} parent=27 // pred_check
        %p228 = pneg %p227
      $region30: #{ce_loss.1} parent=27 // pred_check_branch
        %230 = sbr.rel (%p228) target = $region32
      $region31: #{ce_loss.1} parent=27 // pred_region
        %231 = vst [vmem:[%s225] sm:$0x1] 0.0
      $region32: #{ce_loss.1} parent=27 // pred_fallthru
        _
      %v232 = vld [vmem:[%s208] sm:$0xff]
      %v233 = vld [vmem:[%s208 + $0x8] sm:$0xff]
      %v234 = vld [vmem:[%s208 + $0x10] sm:$0xff]
      %v235 = vld [vmem:[%s208 + $0x18] sm:$0xff]
      %v236 = vld [vmem:[%s208 + $0x20] sm:$0xff]
      %v237 = vld [vmem:[%s208 + $0x28] sm:$0xff]
      %v238 = vld [vmem:[%s208 + $0x30] sm:$0xff]
      %v239 = vld [vmem:[%s208 + $0x38] sm:$0xff]
      %v240 = vld [vmem:[%s208 + $0x40] sm:$0xff]
      %v241 = vld [vmem:[%s208 + $0x48] sm:$0xff]
      %v242 = vld [vmem:[%s208 + $0x50] sm:$0x1]
      %v243 = vld [vmem:[%s208 + $0x58] sm:$0x1]
      %v244 = vld [vmem:[%s219] sm:$0x3]
      %v245 = vmax.f32 %v232, %v236
      %v246 = vmax.f32 %v234, %v238
      %v247 = vmax.f32 %v245, %v240
      %vm248 = vcmask 1040384
      %v249 = vsel %vm248, %v242, -inf
      %v250 = vmax.f32 %v246, %v249
      %v251 = vmax.f32 %v247, %v250
      %v252 = vrot.slane %v251, 4
      %v253 = vmax.f32 %v251, %v252
      %v254 = vrot.slane %v253, 2
      %v255 = vmax.f32 %v253, %v254
      %v256 = vrot.slane %v255, 1
      %v257 = vmax.f32 %v255, %v256
      %v258 = vmax.f32 %v233, %v237
      %v259 = vmax.f32 %v235, %v239
      %v260 = vmax.f32 %v258, %v241
      %v261 = vsel %vm248, %v243, -inf
      %v262 = vmax.f32 %v259, %v261
      %v263 = vmax.f32 %v260, %v262
      %v264 = vrot.slane %v263, 4
      %v265 = vmax.f32 %v263, %v264
      %v266 = vrot.slane %v265, 2
      %v267 = vmax.f32 %v265, %v266
      %v268 = vrot.slane %v267, 1
      %v269 = vmax.f32 %v267, %v268
      %v270 = vsub.f32 %v232, %v257
      %v271 = vsub.f32 %v233, %v269
      %v272 = vsub.f32 %v234, %v257
      %v273 = vsub.f32 %v235, %v269
      %v274 = vsub.f32 %v236, %v257
      %v275 = vsub.f32 %v237, %v269
      %v276 = vsub.f32 %v238, %v257
      %v277 = vsub.f32 %v239, %v269
      %v278 = vsub.f32 %v240, %v257
      %v279 = vsub.f32 %v241, %v269
      %v280 = vsub.f32 %v242, %v257
      %v281 = vsub.f32 %v243, %v269
      %v282 = vmul.f32 %v270, 1.442695
      %v283 = vpow.pop %v282
      %v284 = vmul.f32 %v271, 1.442695
      %v285 = vpow.pop %v284
      %v286 = vmul.f32 %v272, 1.442695
      %v287 = vpow.pop %v286
      %v288 = vmul.f32 %v273, 1.442695
      %v289 = vpow.pop %v288
      %v290 = vmul.f32 %v274, 1.442695
      %v291 = vpow.pop %v290
      %v292 = vmul.f32 %v275, 1.442695
      %v293 = vpow.pop %v292
      %v294 = vmul.f32 %v276, 1.442695
      %v295 = vpow.pop %v294
      %v296 = vmul.f32 %v277, 1.442695
      %v297 = vpow.pop %v296
      %v298 = vmul.f32 %v278, 1.442695
      %v299 = vpow.pop %v298
      %v300 = vmul.f32 %v279, 1.442695
      %v301 = vpow.pop %v300
      %v302 = vmul.f32 %v280, 1.442695
      %v303 = vpow.pop %v302
      %v304 = vmul.f32 %v281, 1.442695
      %v305 = vpow.pop %v304
      %vm306 = vcmask 334848
      %v308 = vsel %vm306, 1.0, 0
      %v311 = vsel %vm248, %v303, 0
      %v314 = vsel %vm248, %v305, 0
      %316 = vmatprep.subr.mxu0 0.0
      %317 = vmatpush1.msra.mxu0 0.0
      %318 = vmatprep.subr.mxu0 0.0
      %319 = vmatpush1.msra.mxu0 0.0
      %320 = vmatprep.subr.mxu0 0.0
      %321 = vmatpush1.msra.mxu0 0.0
      %322 = vmatprep.subr.mxu0 0.0
      %323 = vmatpush1.msra.mxu0 0.0
      %324 = vmatprep.subr.mxu0 0.0
      %325 = vmatpush1.msra.mxu0 0.0
      %326 = vmatprep.subr.mxu0 0.0
      %327 = vmatpush1.msra.mxu0 0.0
      %328 = vmatprep.subr.mxu0 0.0
      %329 = vmatpush1.msra.mxu0 0.0
      %330 = vmatprep.subr.mxu0 0.0
      %331 = vmatpush1.msra.mxu0 0.0
      %332 = vmatprep.subr.mxu0 0.0
      %333 = vmatpush1.msra.mxu0 0.0
      %334 = vmatprep.subr.mxu0 0.0
      %335 = vmatpush1.msra.mxu0 0.0
      %336 = vmatprep.subr.mxu0 %v314
      %337 = vmatpush1.msra.mxu0 %v311
      %338 = vmatprep.subr.mxu0 %v301
      %339 = vmatpush1.msra.mxu0 %v299
      %340 = vmatprep.subr.mxu0 %v297
      %341 = vmatpush1.msra.mxu0 %v295
      %342 = vmatprep.subr.mxu0 %v293
      %343 = vmatpush1.msra.mxu0 %v291
      %344 = vmatprep.subr.mxu0 %v289
      %345 = vmatpush1.msra.mxu0 %v287
      %346 = vmatprep.subr.mxu0 %v285
      %347 = vmatpush1.msra.mxu0 %v283
      %348 = vmatprep.subr.mxu0 0.0
      %349 = vmatpush2.msra.mxu0 0.0
      %350 = vmatprep.subr.mxu0 0.0
      %351 = vmatpush2.msra.mxu0 0.0
      %352 = vmatprep.subr.mxu0 0.0
      %353 = vmatpush2.msra.mxu0 0.0
      %354 = vmatprep.subr.mxu0 0.0
      %355 = vmatpush2.msra.mxu0 0.0
      %356 = vmatprep.subr.mxu0 0.0
      %357 = vmatpush2.msra.mxu0 0.0
      %358 = vmatprep.subr.mxu0 0.0
      %359 = vmatpush2.msra.mxu0 0.0
      %360 = vmatprep.subr.mxu0 0.0
      %361 = vmatpush2.msra.mxu0 0.0
      %362 = vmatprep.subr.mxu0 0.0
      %363 = vmatpush2.msra.mxu0 0.0
      %364 = vmatprep.subr.mxu0 0.0
      %365 = vmatpush2.msra.mxu0 0.0
      %366 = vmatprep.subr.mxu0 0.0
      %367 = vmatpush2.msra.mxu0 0.0
      %368 = vmatprep.subr.mxu0 0.0
      %369 = vmatpush2.msra.mxu0 0.0
      %370 = vmatprep.subr.mxu0 0.0
      %371 = vmatpush2.msra.mxu0 0.0
      %372 = vmatprep.subr.mxu0 0.0
      %373 = vmatpush2.msra.mxu0 0.0
      %374 = vmatprep.subr.mxu0 0.0
      %375 = vmatpush2.msra.mxu0 0.0
      %376 = vmatprep.subr.mxu0 0.0
      %377 = vmatpush2.msra.mxu0 0.0
      %378 = vmatprep.subr.mxu0 0.0
      %379 = vmatpush2.msra.mxu0 0.0
      %380 = vmatprep.mubr.f32.mxu0 0.0
      %381 = vmatmul.mubr.f32.gmra.mxu0 %v308
      %v382 = vpop.f32.mrf.mxu0
      %v383 = vadd.f32 0.0, %v382
      %v384 = vpop.f32.mrf.mxu0
      %v385 = vadd.f32 0.0, %v384
      %386 = vdwg.mxu0
      %v387 = vlaneseq
      %v388 = vshrl.u32 %v387, 7
      %v389 = vadd.s32 %v388, 8
      %v390 = vadd.s32 %v388, 16
      %v391 = vadd.s32 %v388, 24
      %v392 = vadd.s32 %v388, 32
      %v393 = vadd.s32 %v388, 40
      %v394 = vlaneseq
      %v395 = vshrl.u32 %v394, 7
      %v396 = vsub.s32 0, %v395
      %v397 = vrot.slane %v244, %v396
      %v398 = vlaneseq
      %v399 = vshrl.u32 %v398, 7
      %v400 = vsub.s32 1, %v399
      %v401 = vrot.slane %v244, %v400
      %vm402 = vcmp.eq.s32.totalorder %v388, %v397
      %vm403 = vcmp.eq.s32.totalorder %v388, %v401
      %vm404 = vcmp.eq.s32.totalorder %v389, %v397
      %vm405 = vcmp.eq.s32.totalorder %v389, %v401
      %vm406 = vcmp.eq.s32.totalorder %v390, %v397
      %vm407 = vcmp.eq.s32.totalorder %v390, %v401
      %vm408 = vcmp.eq.s32.totalorder %v391, %v397
      %vm409 = vcmp.eq.s32.totalorder %v391, %v401
      %vm410 = vcmp.eq.s32.totalorder %v392, %v397
      %vm411 = vcmp.eq.s32.totalorder %v392, %v401
      %vm412 = vcmp.eq.s32.totalorder %v393, %v397
      %vm413 = vcmp.eq.s32.totalorder %v393, %v401
      %v414 = vsel %vm402, %v270, 0.0
      %v415 = vsel %vm403, %v271, 0.0
      %v416 = vsel %vm404, %v272, 0.0
      %v417 = vsel %vm405, %v273, 0.0
      %v418 = vsel %vm406, %v274, 0.0
      %v419 = vsel %vm407, %v275, 0.0
      %v420 = vsel %vm408, %v276, 0.0
      %v421 = vsel %vm409, %v277, 0.0
      %v422 = vsel %vm410, %v278, 0.0
      %v423 = vsel %vm411, %v279, 0.0
      %v424 = vsel %vm412, %v280, 0.0
      %v425 = vsel %vm413, %v281, 0.0
      %v427 = vsel %vm248, %v424, 0
      %v430 = vsel %vm248, %v425, 0
      %432 = vmatprep.subr.mxu0 0.0
      %433 = vmatpush1.msra.mxu0 0.0
      %434 = vmatprep.subr.mxu0 0.0
      %435 = vmatpush1.msra.mxu0 0.0
      %436 = vmatprep.subr.mxu0 0.0
      %437 = vmatpush1.msra.mxu0 0.0
      %438 = vmatprep.subr.mxu0 0.0
      %439 = vmatpush1.msra.mxu0 0.0
      %440 = vmatprep.subr.mxu0 0.0
      %441 = vmatpush1.msra.mxu0 0.0
      %442 = vmatprep.subr.mxu0 0.0
      %443 = vmatpush1.msra.mxu0 0.0
      %444 = vmatprep.subr.mxu0 0.0
      %445 = vmatpush1.msra.mxu0 0.0
      %446 = vmatprep.subr.mxu0 0.0
      %447 = vmatpush1.msra.mxu0 0.0
      %448 = vmatprep.subr.mxu0 0.0
      %449 = vmatpush1.msra.mxu0 0.0
      %450 = vmatprep.subr.mxu0 0.0
      %451 = vmatpush1.msra.mxu0 0.0
      %452 = vmatprep.subr.mxu0 %v430
      %453 = vmatpush1.msra.mxu0 %v427
      %454 = vmatprep.subr.mxu0 %v423
      %455 = vmatpush1.msra.mxu0 %v422
      %456 = vmatprep.subr.mxu0 %v421
      %457 = vmatpush1.msra.mxu0 %v420
      %458 = vmatprep.subr.mxu0 %v419
      %459 = vmatpush1.msra.mxu0 %v418
      %460 = vmatprep.subr.mxu0 %v417
      %461 = vmatpush1.msra.mxu0 %v416
      %462 = vmatprep.subr.mxu0 %v415
      %463 = vmatpush1.msra.mxu0 %v414
      %464 = vmatprep.subr.mxu0 0.0
      %465 = vmatpush2.msra.mxu0 0.0
      %466 = vmatprep.subr.mxu0 0.0
      %467 = vmatpush2.msra.mxu0 0.0
      %468 = vmatprep.subr.mxu0 0.0
      %469 = vmatpush2.msra.mxu0 0.0
      %470 = vmatprep.subr.mxu0 0.0
      %471 = vmatpush2.msra.mxu0 0.0
      %472 = vmatprep.subr.mxu0 0.0
      %473 = vmatpush2.msra.mxu0 0.0
      %474 = vmatprep.subr.mxu0 0.0
      %475 = vmatpush2.msra.mxu0 0.0
      %476 = vmatprep.subr.mxu0 0.0
      %477 = vmatpush2.msra.mxu0 0.0
      %478 = vmatprep.subr.mxu0 0.0
      %479 = vmatpush2.msra.mxu0 0.0
      %480 = vmatprep.subr.mxu0 0.0
      %481 = vmatpush2.msra.mxu0 0.0
      %482 = vmatprep.subr.mxu0 0.0
      %483 = vmatpush2.msra.mxu0 0.0
      %484 = vmatprep.subr.mxu0 0.0
      %485 = vmatpush2.msra.mxu0 0.0
      %486 = vmatprep.subr.mxu0 0.0
      %487 = vmatpush2.msra.mxu0 0.0
      %488 = vmatprep.subr.mxu0 0.0
      %489 = vmatpush2.msra.mxu0 0.0
      %490 = vmatprep.subr.mxu0 0.0
      %491 = vmatpush2.msra.mxu0 0.0
      %492 = vmatprep.subr.mxu0 0.0
      %493 = vmatpush2.msra.mxu0 0.0
      %494 = vmatprep.subr.mxu0 0.0
      %495 = vmatpush2.msra.mxu0 0.0
      %496 = vmatprep.mubr.f32.mxu0 0.0
      %497 = vmatmul.mubr.f32.gmra.mxu0 %v308
      %v498 = vpop.f32.mrf.mxu0
      %v499 = vadd.f32 0.0, %v498
      %v500 = vpop.f32.mrf.mxu0
      %v501 = vadd.f32 0.0, %v500
      %502 = vdwg.mxu0
      %v503 = vlog2.pop %v383
      %v504 = vmul.f32 %v503, 0.6931472
      %v505 = vlog2.pop %v385
      %v506 = vmul.f32 %v505, 0.6931472
      %vm507 = vcmp.eq.s32.totalorder %v244, 0
      %v508 = vsel %vm507, 0.25, 1.0
      %v509 = vsub.f32 %v504, %v499
      %v510 = vsub.f32 %v506, %v501
      %v513 = vcombine.low %v509, %v510
      %v515 = vunpack.c.l.s4 1966171168
      %v516 = vunpack.c.0.s8 %v515
      %v517 = vlaneseq
      %v518 = vshrl.u32 %v517, 7
      %v519 = vsub.s32 %v516, %v518
      %v520 = vrot.slane %v513, %v519
      %v522 = vunpack.c.l.s4 1966171168
      %v523 = vunpack.c.0.s8 %v522
      %v524 = vlaneseq
      %v525 = vshrl.u32 %v524, 7
      %v526 = vsub.s32 %v523, %v525
      %v527 = vrot.slane %v520, %v526
      %v529 = vmul.f32 %v508, %v527
      %v530 = vld [vmem:[%s225] sm:$0x1]
      %v532 = vlaneseq
      %v533 = vshrl.u32 %v532, 7
      %v534 = vsub.s32 0, %v533
      %v535 = vrot.slane %v529, %v534
      %v536 = vlaneseq
      %v537 = vshrl.u32 %v536, 7
      %v538 = vsub.s32 1, %v537
      %v539 = vrot.slane %v529, %v538
      %v542 = vsel %vm248, %v535, 0.0
      %v543 = vsel %vm248, %v539, 0.0
      %v544 = vadd.f32 %v542, %v543
      %545 = vadd.xlane.f32.xlu0 %v544
      %v546 = vpop.xlane.xlu0 %545
      %v547 = vrot.slane %v546, 4
      %v548 = vadd.f32 %v546, %v547
      %v549 = vrot.slane %v548, 2
      %v550 = vadd.f32 %v548, %v549
      %v551 = vrot.slane %v550, 1
      %v552 = vadd.f32 %v550, %v551
      %s553 = vtos %v552
      %v554 = vstv %s553
      %v555 = vadd.f32 %v530, %v554
      %556 = vst [vmem:[%s225] sm:$0x1] %v555
      // Predicated region
      $region33: #{ce_loss.1} parent=27 // pred_check
        %p557 = pneg %p227
      $region34: #{ce_loss.1} parent=27 // pred_check_branch
        %559 = sbr.rel (%p557) target = $region36
      $region35: #{ce_loss.1} parent=27 // pred_region
        %v560 = vld [vmem:[%s225] sm:$0x1]
        %v561 = vmul.f32 %v560, 0.00390625
        %562 = vst [vmem:[%s225] sm:$0x1] %v561
      $region36: #{ce_loss.1} parent=27 // pred_fallthru
        _
      %s563 = sadd.s32 %s18, %s19
      %p564 = scmp.lt.s32.totalorder %s563, 1
      %s565 = scalar_select %p564, %s563, 1
      %s566 = scalar_lea.vmem %s2, %s565
      // Predicated region
      $region37: #{ce_loss.1} parent=27 // pred_check
        %p567 = pneg %p112
      $region38: #{ce_loss.1} parent=27 // pred_check_branch
        %569 = sbr.rel (%p567) target = $region40
      $region39: #{ce_loss.1} parent=27 // pred_region
        %s570 = sadd.s32 %s18, %s19
      $region40: #{ce_loss.1} parent=27 // pred_fallthru
        _
    $region28: #{ce_loss.1} parent=5 // pred_fallthru
      _
    %p571 = scmp.le.s32.totalorder 2, %s8
    // Predicated region
    $region41: #{ce_loss.1} parent=5 // pred_check
      %p572 = pneg %p571
    $region42: #{ce_loss.1} parent=5 // pred_check_branch
      %574 = sbr.rel (%p572) target = $region44
    $region43: #{ce_loss.1} parent=5 // pred_region
      %s575 = ssub.s32 %s8, 2
      // Predicated region
      $region45: #{ce_loss.1} parent=43 // pred_check
        %p576 = pneg %p118
      $region46: #{ce_loss.1} parent=43 // pred_check_branch
        %578 = sbr.rel (%p576) target = $region48
      $region47: #{ce_loss.1} parent=43 // pred_region
        %s579 = sadd.s32 %s21, %s22
        %p580 = scmp.lt.s32.totalorder %s579, 1
        %s581 = scalar_select %p580, %s579, 1
        %s582 = scalar_lea.vmem %s2, %s581
      $region48: #{ce_loss.1} parent=43 // pred_fallthru
        _
    $region44: #{ce_loss.1} parent=5 // pred_fallthru
      _
  $region6: #{ce_loss.1} parent=0 // loop_footer
    %s12 = sadd.s32 1, %s8
  $region7: #{ce_loss.1} parent=0 // loop_footer_branch
    %7 = sbr.rel target = $region3
  $region8: #{ce_loss.1} parent=0 // loop_exit
    _

</llo_original>
